<compile_context>
chip_gen: v7x
topology: tpu7x:2x2x1
jax: 0.10.0
libtpu: 0.0.40
codegen_flags: <defaults>
</compile_context>

<pallas_src>
import jax
import jax.numpy as jnp
from jax.experimental import pallas as pl
from jax.experimental.pallas import tpu as pltpu


def _round_up(x, m):
    return ((x + m - 1) // m) * m


# ---------------------------------------------------------------------------
# Kernel
# ---------------------------------------------------------------------------
def _critic_kernel(s_ref, a_ref, w1s_ref, w1a_ref, b1_ref, w2_ref, b2_ref,
                   w3_ref, b3_ref, o_ref):
    """One batch tile: o_ref[0, t] = Q(state[t], action[t])."""
    cdt = w2_ref.dtype  # MXU operand dtype (f32 for parity, bf16 optional)

    # fc1 as a split matmul: avoids a lane-axis concat of the 12/4-wide inputs.
    h1 = (jnp.dot(s_ref[...].astype(cdt), w1s_ref[...],
                  preferred_element_type=jnp.float32)
          + jnp.dot(a_ref[...].astype(cdt), w1a_ref[...],
                    preferred_element_type=jnp.float32)
          + b1_ref[...])
    h1 = jnp.maximum(h1, 0.0)

    # fc2 + ReLU (f32 accumulation regardless of operand dtype).
    h2 = jnp.dot(h1.astype(cdt), w2_ref[...],
                 preferred_element_type=jnp.float32) + b2_ref[...]
    h2 = jnp.maximum(h2, 0.0)

    # Q head (out_features == 1): transpose on the XLU (idle at this point)
    # then a sublane reduction -> a lane-dense (1, TB) row.  This avoids both
    # an N=1 MXU dot and a lane-sparse (TB, 1) output tile of masked stores.
    h2t = h2.T                                           # (Hp, TB)
    q = jnp.sum(h2t * w3_ref[...], axis=0, keepdims=True) + b3_ref[...]
    o_ref[...] = q.astype(o_ref.dtype)


# ---------------------------------------------------------------------------
# Tile selection
# ---------------------------------------------------------------------------
_MAX_TILE = 2048    # rows per grid step; working set stays well inside every
                    # generation's scoped-VMEM default (v5e 16 MiB)
_MIN_SPLIT = 256    # below this, one grid step beats paying extra step overhead


def _pick_batch_tile(B):
    """Rows per grid step.

    * B < _MIN_SPLIT: single full-extent block (grid of 1); splitting a tiny
      batch only adds ~0.35 us per extra step.
    * otherwise: >= 2 steps so the "parallel" batch axis lands work on both
      TensorCores on v7x (harmless on v5e/v6e), each step as large as
      possible (<= _MAX_TILE) to amortize per-step overhead.  Tiles are
      multiples of 128 so the lane-dense (1, TB) output block satisfies the
      (8, 128) rule; the trailing edge block is handled by Pallas masking.
    """
    if B < _MIN_SPLIT:
        return B
    steps = max(2, pl.cdiv(B, _MAX_TILE))
    return min(_MAX_TILE, _round_up(pl.cdiv(B, steps), 128))


# ---------------------------------------------------------------------------
# One-time parameter preparation (hoisted out of the per-call forward)
# ---------------------------------------------------------------------------
def prepare_critic_params(params, state_dim, compute_dtype=jnp.float32):
    """Split fc1, zero-pad the hidden dim to a multiple of 128 lanes (exact
    no-op: padded rows/cols/bias are zero), and lay out the head weight as a
    column.  Optionally store the matmul operands in bf16 (f32 accumulation
    happens in-kernel).  Call once; reuse the result for every forward."""
    w1, b1, w2, b2, w3, b3 = params
    H = w1.shape[1]
    Hp = _round_up(H, 128)
    pad = Hp - H

    w1s = jnp.pad(w1[:state_dim], ((0, 0), (0, pad)))
    w1a = jnp.pad(w1[state_dim:], ((0, 0), (0, pad)))
    b1p = jnp.pad(b1, ((0, 0), (0, pad)))
    w2p = jnp.pad(w2, ((0, pad), (0, pad)))
    b2p = jnp.pad(b2, ((0, 0), (0, pad)))
    w3c = jnp.pad(w3, ((0, pad), (0, 0)))          # (Hp, 1) column for the head

    return (w1s.astype(compute_dtype), w1a.astype(compute_dtype), b1p,
            w2p.astype(compute_dtype), b2p, w3c, b3)


# ---------------------------------------------------------------------------
# Forward pass
# ---------------------------------------------------------------------------
@jax.jit
def critic_forward(state, action, prepared_params):
    """state: [B, S] f32, action: [B, A] f32, prepared_params from
    `prepare_critic_params`.  Returns [B, 1] f32."""
    w1s, w1a, b1, w2, b2, w3, b3 = prepared_params
    B, S = state.shape
    A = action.shape[1]
    Hp = w1s.shape[1]

    TB = _pick_batch_tile(B)
    grid = (pl.cdiv(B, TB),)

    def resident(shape):
        # Same block every grid step -> DMA'd once, stays VMEM-resident.
        # TODO(synk): at production hidden sizes add pipeline_mode=pl.Buffered(1)
        # so constant weight blocks are not double-buffered (matters on v7x's
        # 64 MiB VMEM); irrelevant at these sizes.
        return pl.BlockSpec(shape, lambda i: (0, 0))

    out = pl.pallas_call(
        _critic_kernel,
        out_shape=jax.ShapeDtypeStruct((1, B), jnp.float32),
        grid=grid,
        in_specs=[
            pl.BlockSpec((TB, S), lambda i: (i, 0)),   # state rows
            pl.BlockSpec((TB, A), lambda i: (i, 0)),   # action rows
            resident((S, Hp)),                          # W1[:S]
            resident((A, Hp)),                          # W1[S:]
            resident((1, Hp)),                          # b1
            resident((Hp, Hp)),                         # W2
            resident((1, Hp)),                          # b2
            resident((Hp, 1)),                          # w3 (column)
            resident((1, 1)),                           # b3
        ],
        out_specs=pl.BlockSpec((1, TB), lambda i: (0, i)),   # lane-dense rows
        compiler_params=pltpu.CompilerParams(
            dimension_semantics=("parallel",)),        # megacore on v7x
        # NOTE: set vmem_limit_bytes here if TB or hidden_dim is scaled up
        # (v5e's scoped default is only 16 MiB); unnecessary at these sizes.
    )(state, action, w1s, w1a, b1, w2, b2, w3, b3)

    # (1, B) -> (B, 1): row-major bitcast, free under jit (no pad, no slice).
    return out.reshape(B, 1)


# ---------------------------------------------------------------------------
# Init + pure-JAX reference
# ---------------------------------------------------------------------------
def init_critic_params(key, state_dim, action_dim, hidden_dim):
    """Mimics PyTorch's default nn.Linear init (uniform +-1/sqrt(fan_in)).
    Weights stored as [in, out]."""
    def linear(key, fan_in, fan_out):
        kw, kb = jax.random.split(key)
        bound = 1.0 / jnp.sqrt(fan_in)
        w = jax.random.uniform(kw, (fan_in, fan_out), jnp.float32, -bound, bound)
        b = jax.random.uniform(kb, (1, fan_out), jnp.float32, -bound, bound)
        return w, b

    k1, k2, k3 = jax.random.split(key, 3)
    w1, b1 = linear(k1, state_dim + action_dim, hidden_dim)
    w2, b2 = linear(k2, hidden_dim, hidden_dim)
    w3, b3 = linear(k3, hidden_dim, 1)
    return (w1, b1, w2, b2, w3, b3)


def critic_reference(state, action, params):
    """Pure-JAX reference (HIGHEST precision so XLA's default low-precision
    f32 matmul on TPU does not pollute the comparison)."""
    w1, b1, w2, b2, w3, b3 = params
    hi = jax.lax.Precision.HIGHEST
    x = jnp.concatenate([state, action], axis=-1)
    x = jnp.maximum(jnp.dot(x, w1, precision=hi) + b1, 0.0)
    x = jnp.maximum(jnp.dot(x, w2, precision=hi) + b2, 0.0)
    return jnp.dot(x, w3, precision=hi) + b3


if __name__ == "__main__":
    # Small shapes consistent with the module's forward.
    batch = 8
    state_dim = 12
    action_dim = 4
    hidden_dim = 32

    key = jax.random.PRNGKey(0)
    k_state, k_action, k_params = jax.random.split(key, 3)

    state = jax.random.normal(k_state, (batch, state_dim), jnp.float32)
    action = jax.random.normal(k_action, (batch, action_dim), jnp.float32)
    params = init_critic_params(k_params, state_dim, action_dim, hidden_dim)

    # One-time weight preparation (kept out of the per-call forward).
    prepared = prepare_critic_params(params, state_dim)

    q = jax.block_until_ready(critic_forward(state, action, prepared))
    q_ref = critic_reference(state, action, params)
    assert q.shape == (batch, 1), q.shape
    assert jnp.allclose(q, q_ref, atol=1e-4, rtol=1e-4), (q, q_ref)

    # Training-scale, non-tile-multiple batch exercising the multi-step grid
    # (>= 2 parallel steps) and edge-block masking (no pad / no slice).
    big_b = 1000
    kb1, kb2 = jax.random.split(jax.random.PRNGKey(1))
    big_state = jax.random.normal(kb1, (big_b, state_dim), jnp.float32)
    big_action = jax.random.normal(kb2, (big_b, action_dim), jnp.float32)
    q_big = jax.block_until_ready(critic_forward(big_state, big_action, prepared))
    q_big_ref = critic_reference(big_state, big_action, params)
    assert q_big.shape == (big_b, 1), q_big.shape
    assert jnp.allclose(q_big, q_big_ref, atol=1e-4, rtol=1e-4)

    # Optional bf16-operand path (f32 accumulation) for v6e/v7x, loose tolerance.
    prepared_bf16 = prepare_critic_params(params, state_dim,
                                          compute_dtype=jnp.bfloat16)
    q_bf16 = jax.block_until_ready(critic_forward(big_state, big_action,
                                                  prepared_bf16))
    assert q_bf16.shape == (big_b, 1), q_bf16.shape
    assert jnp.allclose(q_bf16, q_big_ref, atol=5e-2, rtol=5e-2)

    print("KERNEL_OK")
</pallas_src>

<mosaic_0001>
module attributes {stable_mosaic.version = 11 : i64} {
  func.func @_critic_kernel(%arg0: i32, %arg1: memref<8x12xf32, #tpu.memory_space<vmem>>, %arg2: memref<8x4xf32, #tpu.memory_space<vmem>>, %arg3: memref<12x128xf32, #tpu.memory_space<vmem>>, %arg4: memref<4x128xf32, #tpu.memory_space<vmem>>, %arg5: memref<1x128xf32, #tpu.memory_space<vmem>>, %arg6: memref<128x128xf32, #tpu.memory_space<vmem>>, %arg7: memref<1x128xf32, #tpu.memory_space<vmem>>, %arg8: memref<128x1xf32, #tpu.memory_space<vmem>>, %arg9: memref<1x1xf32, #tpu.memory_space<vmem>>, %arg10: memref<1x8xf32, #tpu.memory_space<vmem>>) attributes {dimension_semantics = [#tpu.dimension_semantics<parallel>], iteration_bounds = array<i64: 1>, scalar_prefetch = 0 : i64, scratch_operands = 0 : i64, tpu.core_type = #tpu.core_type<tc>, window_params = [{transform_indices = @transform_0, window_bounds = array<i64: 8, 12>}, {transform_indices = @transform_1, window_bounds = array<i64: 8, 4>}, {pipeline_mode = #tpu.pipeline_mode<synchronous>, transform_indices = @transform_2, window_bounds = array<i64: 12, 128>}, {pipeline_mode = #tpu.pipeline_mode<synchronous>, transform_indices = @transform_3, window_bounds = array<i64: 4, 128>}, {pipeline_mode = #tpu.pipeline_mode<synchronous>, transform_indices = @transform_4, window_bounds = array<i64: 1, 128>}, {pipeline_mode = #tpu.pipeline_mode<synchronous>, transform_indices = @transform_5, window_bounds = array<i64: 128, 128>}, {pipeline_mode = #tpu.pipeline_mode<synchronous>, transform_indices = @transform_6, window_bounds = array<i64: 1, 128>}, {pipeline_mode = #tpu.pipeline_mode<synchronous>, transform_indices = @transform_7, window_bounds = array<i64: 128, 1>}, {pipeline_mode = #tpu.pipeline_mode<synchronous>, transform_indices = @transform_8, window_bounds = array<i64: 1, 1>}, {transform_indices = @transform_9, window_bounds = array<i64: 1, 8>}]} {
    %c0 = arith.constant 0 : index
    %c0_0 = arith.constant 0 : index
    %0 = vector.load %arg1[%c0, %c0_0] : memref<8x12xf32, #tpu.memory_space<vmem>>, vector<8x12xf32>
    %c0_1 = arith.constant 0 : index
    %c0_2 = arith.constant 0 : index
    %1 = vector.load %arg3[%c0_1, %c0_2] : memref<12x128xf32, #tpu.memory_space<vmem>>, vector<12x128xf32>
    %cst = arith.constant dense<0.000000e+00> : vector<8x128xf32>
    %2 = tpu.matmul %0, %1, %cst {dimension_numbers = #tpu.dot_dimension_numbers<[1], [0], [0], [1], [0, 0, 1, 1], [], []>} : vector<8x12xf32>, vector<12x128xf32>, vector<8x128xf32> -> vector<8x128xf32>
    %c0_3 = arith.constant 0 : index
    %c0_4 = arith.constant 0 : index
    %3 = vector.load %arg2[%c0_3, %c0_4] : memref<8x4xf32, #tpu.memory_space<vmem>>, vector<8x4xf32>
    %c0_5 = arith.constant 0 : index
    %c0_6 = arith.constant 0 : index
    %4 = vector.load %arg4[%c0_5, %c0_6] : memref<4x128xf32, #tpu.memory_space<vmem>>, vector<4x128xf32>
    %cst_7 = arith.constant dense<0.000000e+00> : vector<8x128xf32>
    %5 = tpu.matmul %3, %4, %cst_7 {dimension_numbers = #tpu.dot_dimension_numbers<[1], [0], [0], [1], [0, 0, 1, 1], [], []>} : vector<8x4xf32>, vector<4x128xf32>, vector<8x128xf32> -> vector<8x128xf32>
    %6 = arith.addf %2, %5 : vector<8x128xf32>
    %c0_8 = arith.constant 0 : index
    %c0_9 = arith.constant 0 : index
    %7 = vector.load %arg5[%c0_8, %c0_9] : memref<1x128xf32, #tpu.memory_space<vmem>>, vector<1x128xf32>
    %8 = vector.broadcast %7 : vector<1x128xf32> to vector<8x128xf32>
    %9 = arith.addf %6, %8 : vector<8x128xf32>
    %cst_10 = arith.constant 0.000000e+00 : f32
    %10 = vector.broadcast %cst_10 : f32 to vector<8x128xf32>
    %11 = arith.maximumf %9, %10 : vector<8x128xf32>
    %c0_11 = arith.constant 0 : index
    %c0_12 = arith.constant 0 : index
    %12 = vector.load %arg6[%c0_11, %c0_12] : memref<128x128xf32, #tpu.memory_space<vmem>>, vector<128x128xf32>
    %cst_13 = arith.constant dense<0.000000e+00> : vector<8x128xf32>
    %13 = tpu.matmul %11, %12, %cst_13 {dimension_numbers = #tpu.dot_dimension_numbers<[1], [0], [0], [1], [0, 0, 1, 1], [], []>} : vector<8x128xf32>, vector<128x128xf32>, vector<8x128xf32> -> vector<8x128xf32>
    %c0_14 = arith.constant 0 : index
    %c0_15 = arith.constant 0 : index
    %14 = vector.load %arg7[%c0_14, %c0_15] : memref<1x128xf32, #tpu.memory_space<vmem>>, vector<1x128xf32>
    %15 = vector.broadcast %14 : vector<1x128xf32> to vector<8x128xf32>
    %16 = arith.addf %13, %15 : vector<8x128xf32>
    %cst_16 = arith.constant 0.000000e+00 : f32
    %17 = vector.broadcast %cst_16 : f32 to vector<8x128xf32>
    %18 = arith.maximumf %16, %17 : vector<8x128xf32>
    %19 = tpu.transpose %18, [1, 0] : vector<8x128xf32> -> vector<128x8xf32>
    %c0_17 = arith.constant 0 : index
    %c0_18 = arith.constant 0 : index
    %20 = vector.load %arg8[%c0_17, %c0_18] : memref<128x1xf32, #tpu.memory_space<vmem>>, vector<128x1xf32>
    %21 = vector.broadcast %20 : vector<128x1xf32> to vector<128x8xf32>
    %22 = arith.mulf %19, %21 : vector<128x8xf32>
    %cst_19 = arith.constant dense<0.000000e+00> : vector<8xf32>
    %23 = vector.multi_reduction <add>, %22, %cst_19 [0] : vector<128x8xf32> to vector<8xf32>
    %24 = vector.shape_cast %23 : vector<8xf32> to vector<1x8xf32>
    %c0_20 = arith.constant 0 : index
    %c0_21 = arith.constant 0 : index
    %25 = vector.load %arg9[%c0_20, %c0_21] : memref<1x1xf32, #tpu.memory_space<vmem>>, vector<1x1xf32>
    %26 = vector.broadcast %25 : vector<1x1xf32> to vector<1x8xf32>
    %27 = arith.addf %24, %26 : vector<1x8xf32>
    %c0_22 = arith.constant 0 : index
    %c0_23 = arith.constant 0 : index
    %28 = vector.load %arg10[%c0_22, %c0_23] : memref<1x8xf32, #tpu.memory_space<vmem>>, vector<1x8xf32>
    tpu.vector_store %arg10[%c0_22, %c0_23], %27 {strides = array<i32>} : memref<1x8xf32, #tpu.memory_space<vmem>>, vector<1x8xf32>,
    return
  }
  func.func @transform_0(%arg0: i32) -> (i32, i32) {
    %c0_i32 = arith.constant 0 : i32
    %c0_i32_0 = arith.constant 0 : i32
    return %arg0, %c0_i32 : i32, i32
  }
  func.func @transform_1(%arg0: i32) -> (i32, i32) {
    %c0_i32 = arith.constant 0 : i32
    %c0_i32_0 = arith.constant 0 : i32
    return %arg0, %c0_i32 : i32, i32
  }
  func.func @transform_2(%arg0: i32) -> (i32, i32) {
    %c0_i32 = arith.constant 0 : i32
    %c0_i32_0 = arith.constant 0 : i32
    %c0_i32_1 = arith.constant 0 : i32
    return %c0_i32, %c0_i32_0 : i32, i32
  }
  func.func @transform_3(%arg0: i32) -> (i32, i32) {
    %c0_i32 = arith.constant 0 : i32
    %c0_i32_0 = arith.constant 0 : i32
    %c0_i32_1 = arith.constant 0 : i32
    return %c0_i32, %c0_i32_0 : i32, i32
  }
  func.func @transform_4(%arg0: i32) -> (i32, i32) {
    %c0_i32 = arith.constant 0 : i32
    %c0_i32_0 = arith.constant 0 : i32
    %c0_i32_1 = arith.constant 0 : i32
    return %c0_i32, %c0_i32_0 : i32, i32
  }
  func.func @transform_5(%arg0: i32) -> (i32, i32) {
    %c0_i32 = arith.constant 0 : i32
    %c0_i32_0 = arith.constant 0 : i32
    %c0_i32_1 = arith.constant 0 : i32
    return %c0_i32, %c0_i32_0 : i32, i32
  }
  func.func @transform_6(%arg0: i32) -> (i32, i32) {
    %c0_i32 = arith.constant 0 : i32
    %c0_i32_0 = arith.constant 0 : i32
    %c0_i32_1 = arith.constant 0 : i32
    return %c0_i32, %c0_i32_0 : i32, i32
  }
  func.func @transform_7(%arg0: i32) -> (i32, i32) {
    %c0_i32 = arith.constant 0 : i32
    %c0_i32_0 = arith.constant 0 : i32
    %c0_i32_1 = arith.constant 0 : i32
    return %c0_i32, %c0_i32_0 : i32, i32
  }
  func.func @transform_8(%arg0: i32) -> (i32, i32) {
    %c0_i32 = arith.constant 0 : i32
    %c0_i32_0 = arith.constant 0 : i32
    %c0_i32_1 = arith.constant 0 : i32
    return %c0_i32, %c0_i32_0 : i32, i32
  }
  func.func @transform_9(%arg0: i32) -> (i32, i32) {
    %c0_i32 = arith.constant 0 : i32
    %c0_i32_0 = arith.constant 0 : i32
    return %c0_i32, %arg0 : i32, i32
  }
}

</mosaic_0001>

<llo_original>
// kernel: critic_forward.1
$region0: #{critic_forward.1}
  #allocation0 [shape = 'u32[]', space=smem, size = 0x4, offset = 0x4, fixed_abs, tag = 'smem constant byte address 0x4 - core index']
  #allocation1 [shape = 'u32[144,128]{1,0:T(1,128)}', space=vmem, size = 0x12000, scoped, tag = 'internal scratch']
  #allocation2 [shape = 'f32[1,1]{1,0:T(1,128)S(1)}', space=vmem, size = 0x200, scoped, tag = 'scoped memory for critic_forward.1']
  %s0 = inlined_call_operand.vmem [shape: f32[8,12], index: 0, kind: input, shape index: {}]
  %s1 = inlined_call_operand.vmem [shape: f32[8,4], index: 1, kind: input, shape index: {}]
  %s2 = inlined_call_operand.vmem [shape: f32[12,128], index: 2, kind: input, shape index: {}]
  %s3 = inlined_call_operand.vmem [shape: f32[4,128], index: 3, kind: input, shape index: {}]
  %s4 = inlined_call_operand.vmem [shape: f32[1,128], index: 4, kind: input, shape index: {}]
  %s5 = inlined_call_operand.vmem [shape: f32[128,128], index: 5, kind: input, shape index: {}]
  %s6 = inlined_call_operand.vmem [shape: f32[1,128], index: 6, kind: input, shape index: {}]
  %s7 = inlined_call_operand.vmem [shape: f32[128,1], index: 7, kind: input, shape index: {}]
  %s8 = inlined_call_operand.<no memory space> [shape: f32[1,1], index: 8, kind: input, shape index: {}]
  %s9 = inlined_call_operand.hbm [shape: f32[1,8], index: 9, kind: output, shape index: {}]
  %s10 = sld [smem:[#allocation0]]
  $region46: #{critic_forward.1} parent=0
    _
  %s12 = ssub.s32 1, %s10
  %s13 = scalar_select 0, %s12, %s10
  %v14 = vstv %s8
  %15 = vst [vmem:[#allocation2] sm:$0x1] %v14
  $region1: #{critic_forward.1} parent=0
    #allocation3 [shape = 'u8[512]{0}', space=vmem, size = 0x400, scoped, tag = 'output window, operand 0, single buffered']
    #allocation4 [shape = 's32[1]{0}', space=sflag, size = 0x4, scoped, tag = 'scoped memory for critic_forward.1']
    %16 = vsyncpa [#allocation4], 0
    // Predicated region
    $region2: #{critic_forward.1} parent=1 // pred_check
      _
    $region3: #{critic_forward.1} parent=1 // pred_check_branch
      %18 = sbr.rel (0) target = $region5
    $region4: #{critic_forward.1} parent=1 // pred_region
      _
    $region5: #{critic_forward.1} parent=1 // pred_fallthru
      _
    // Predicated region
    $region6: #{critic_forward.1} parent=1 // pred_check
      _
    $region7: #{critic_forward.1} parent=1 // pred_check_branch
      %20 = sbr.rel (0) target = $region9
    $region8: #{critic_forward.1} parent=1 // pred_region
      _
    $region9: #{critic_forward.1} parent=1 // pred_fallthru
      _
    // Predicated region
    $region10: #{critic_forward.1} parent=1 // pred_check
      _
    $region11: #{critic_forward.1} parent=1 // pred_check_branch
      %22 = sbr.rel (0) target = $region13
    $region12: #{critic_forward.1} parent=1 // pred_region
      _
    $region13: #{critic_forward.1} parent=1 // pred_fallthru
      _
    // Predicated region
    $region14: #{critic_forward.1} parent=1 // pred_check
      _
    $region15: #{critic_forward.1} parent=1 // pred_check_branch
      %24 = sbr.rel (0) target = $region17
    $region16: #{critic_forward.1} parent=1 // pred_region
      _
    $region17: #{critic_forward.1} parent=1 // pred_fallthru
      _
    // Predicated region
    $region18: #{critic_forward.1} parent=1 // pred_check
      _
    $region19: #{critic_forward.1} parent=1 // pred_check_branch
      %26 = sbr.rel (0) target = $region21
    $region20: #{critic_forward.1} parent=1 // pred_region
      _
    $region21: #{critic_forward.1} parent=1 // pred_fallthru
      _
    // Predicated region
    $region22: #{critic_forward.1} parent=1 // pred_check
      _
    $region23: #{critic_forward.1} parent=1 // pred_check_branch
      %28 = sbr.rel (0) target = $region25
    $region24: #{critic_forward.1} parent=1 // pred_region
      _
    $region25: #{critic_forward.1} parent=1 // pred_fallthru
      _
    // Predicated region
    $region26: #{critic_forward.1} parent=1 // pred_check
      _
    $region27: #{critic_forward.1} parent=1 // pred_check_branch
      %30 = sbr.rel (0) target = $region29
    $region28: #{critic_forward.1} parent=1 // pred_region
      _
    $region29: #{critic_forward.1} parent=1 // pred_fallthru
      _
    // Predicated region
    $region30: #{critic_forward.1} parent=1 // pred_check
      _
    $region31: #{critic_forward.1} parent=1 // pred_check_branch
      %32 = sbr.rel (0) target = $region33
    $region32: #{critic_forward.1} parent=1 // pred_region
      _
    $region33: #{critic_forward.1} parent=1 // pred_fallthru
      _
    // Predicated region
    $region34: #{critic_forward.1} parent=1 // pred_check
      _
    $region35: #{critic_forward.1} parent=1 // pred_check_branch
      %34 = sbr.rel (0) target = $region37
    $region36: #{critic_forward.1} parent=1 // pred_region
      _
    $region37: #{critic_forward.1} parent=1 // pred_fallthru
      _
    %v35 = vld [vmem:[%s0] sm:$0xff]
    %v36 = vld [vmem:[%s2] sm:$0xff]
    %v37 = vld [vmem:[%s2 + $0x8] sm:$0xf]
    %v38 = vld [vmem:[%s1] sm:$0xff]
    %v39 = vld [vmem:[%s3] sm:$0xf]
    %vm40 = vcmask 31744
    %v42 = vsel %vm40, %v38, 0
    %vm44 = vcmask 1043456
    %v46 = vsel %vm44, %v39, 0
    %48 = vmatprep.subr.mxu0 0.0
    %49 = vmatpush1.msra.mxu0 %v46
    %50 = vmatprep.subr.mxu0 0.0
    %51 = vmatpush1.msra.mxu0 0.0
    %52 = vmatprep.subr.mxu0 0.0
    %53 = vmatpush1.msra.mxu0 0.0
    %54 = vmatprep.subr.mxu0 0.0
    %55 = vmatpush1.msra.mxu0 0.0
    %56 = vmatprep.subr.mxu0 0.0
    %57 = vmatpush1.msra.mxu0 0.0
    %58 = vmatprep.subr.mxu0 0.0
    %59 = vmatpush1.msra.mxu0 0.0
    %60 = vmatprep.subr.mxu0 0.0
    %61 = vmatpush1.msra.mxu0 0.0
    %62 = vmatprep.subr.mxu0 0.0
    %63 = vmatpush1.msra.mxu0 0.0
    %64 = vmatprep.subr.mxu0 0.0
    %65 = vmatpush1.msra.mxu0 0.0
    %66 = vmatprep.subr.mxu0 0.0
    %67 = vmatpush1.msra.mxu0 0.0
    %68 = vmatprep.subr.mxu0 0.0
    %69 = vmatpush1.msra.mxu0 0.0
    %70 = vmatprep.subr.mxu0 0.0
    %71 = vmatpush1.msra.mxu0 0.0
    %72 = vmatprep.subr.mxu0 0.0
    %73 = vmatpush1.msra.mxu0 0.0
    %74 = vmatprep.subr.mxu0 0.0
    %75 = vmatpush1.msra.mxu0 0.0
    %76 = vmatprep.subr.mxu0 0.0
    %77 = vmatpush1.msra.mxu0 0.0
    %78 = vmatprep.subr.mxu0 0.0
    %79 = vmatpush1.msra.mxu0 0.0
    %80 = vmatprep.subr.mxu0 0.0
    %81 = vmatpush1.msra.mxu0 0.0
    %82 = vmatprep.subr.mxu0 0.0
    %83 = vmatpush1.msra.mxu0 0.0
    %84 = vmatprep.subr.mxu0 0.0
    %85 = vmatpush1.msra.mxu0 0.0
    %86 = vmatprep.subr.mxu0 0.0
    %87 = vmatpush1.msra.mxu0 0.0
    %88 = vmatprep.subr.mxu0 0.0
    %89 = vmatpush1.msra.mxu0 0.0
    %90 = vmatprep.subr.mxu0 0.0
    %91 = vmatpush1.msra.mxu0 0.0
    %92 = vmatprep.subr.mxu0 0.0
    %93 = vmatpush1.msra.mxu0 0.0
    %94 = vmatprep.subr.mxu0 0.0
    %95 = vmatpush1.msra.mxu0 0.0
    %96 = vmatprep.subr.mxu0 0.0
    %97 = vmatpush1.msra.mxu0 0.0
    %98 = vmatprep.subr.mxu0 0.0
    %99 = vmatpush1.msra.mxu0 0.0
    %100 = vmatprep.subr.mxu0 0.0
    %101 = vmatpush1.msra.mxu0 0.0
    %102 = vmatprep.subr.mxu0 0.0
    %103 = vmatpush1.msra.mxu0 0.0
    %104 = vmatprep.subr.mxu0 0.0
    %105 = vmatpush1.msra.mxu0 0.0
    %106 = vmatprep.subr.mxu0 0.0
    %107 = vmatpush1.msra.mxu0 0.0
    %108 = vmatprep.subr.mxu0 0.0
    %109 = vmatpush1.msra.mxu0 0.0
    %110 = vmatprep.subr.mxu0 0.0
    %111 = vmatpush1.msra.mxu0 0.0
    %112 = vmatprep.mubr.f32.mxu0 0.0
    %113 = vmatmul.mubr.f32.gmra.mrb[0].mxu0 %v42
    %v114 = vpop.f32.mrb[0].mxu0
    %v115 = vadd.f32 0.0, %v114
    %v116 = vpop.f32.mrb[0].mxu0
    %117 = vdwg.mxu0
    %vm118 = vcmask 97280
    %v120 = vsel %vm118, %v35, 0
    %v123 = vsel %vm44, %v37, 0
    %125 = vmatprep.subr.mxu0 0.0
    %126 = vmatpush1.msra.mxu0 %v36
    %127 = vmatprep.subr.mxu0 0.0
    %128 = vmatpush1.msra.mxu0 %v123
    %129 = vmatprep.subr.mxu0 0.0
    %130 = vmatpush1.msra.mxu0 0.0
    %131 = vmatprep.subr.mxu0 0.0
    %132 = vmatpush1.msra.mxu0 0.0
    %133 = vmatprep.subr.mxu0 0.0
    %134 = vmatpush1.msra.mxu0 0.0
    %135 = vmatprep.subr.mxu0 0.0
    %136 = vmatpush1.msra.mxu0 0.0
    %137 = vmatprep.subr.mxu0 0.0
    %138 = vmatpush1.msra.mxu0 0.0
    %139 = vmatprep.subr.mxu0 0.0
    %140 = vmatpush1.msra.mxu0 0.0
    %141 = vmatprep.subr.mxu0 0.0
    %142 = vmatpush1.msra.mxu0 0.0
    %143 = vmatprep.subr.mxu0 0.0
    %144 = vmatpush1.msra.mxu0 0.0
    %145 = vmatprep.subr.mxu0 0.0
    %146 = vmatpush1.msra.mxu0 0.0
    %147 = vmatprep.subr.mxu0 0.0
    %148 = vmatpush1.msra.mxu0 0.0
    %149 = vmatprep.subr.mxu0 0.0
    %150 = vmatpush1.msra.mxu0 0.0
    %151 = vmatprep.subr.mxu0 0.0
    %152 = vmatpush1.msra.mxu0 0.0
    %153 = vmatprep.subr.mxu0 0.0
    %154 = vmatpush1.msra.mxu0 0.0
    %155 = vmatprep.subr.mxu0 0.0
    %156 = vmatpush1.msra.mxu0 0.0
    %157 = vmatprep.subr.mxu0 0.0
    %158 = vmatpush1.msra.mxu0 0.0
    %159 = vmatprep.subr.mxu0 0.0
    %160 = vmatpush1.msra.mxu0 0.0
    %161 = vmatprep.subr.mxu0 0.0
    %162 = vmatpush1.msra.mxu0 0.0
    %163 = vmatprep.subr.mxu0 0.0
    %164 = vmatpush1.msra.mxu0 0.0
    %165 = vmatprep.subr.mxu0 0.0
    %166 = vmatpush1.msra.mxu0 0.0
    %167 = vmatprep.subr.mxu0 0.0
    %168 = vmatpush1.msra.mxu0 0.0
    %169 = vmatprep.subr.mxu0 0.0
    %170 = vmatpush1.msra.mxu0 0.0
    %171 = vmatprep.subr.mxu0 0.0
    %172 = vmatpush1.msra.mxu0 0.0
    %173 = vmatprep.subr.mxu0 0.0
    %174 = vmatpush1.msra.mxu0 0.0
    %175 = vmatprep.subr.mxu0 0.0
    %176 = vmatpush1.msra.mxu0 0.0
    %177 = vmatprep.subr.mxu0 0.0
    %178 = vmatpush1.msra.mxu0 0.0
    %179 = vmatprep.subr.mxu0 0.0
    %180 = vmatpush1.msra.mxu0 0.0
    %181 = vmatprep.subr.mxu0 0.0
    %182 = vmatpush1.msra.mxu0 0.0
    %183 = vmatprep.subr.mxu0 0.0
    %184 = vmatpush1.msra.mxu0 0.0
    %185 = vmatprep.subr.mxu0 0.0
    %186 = vmatpush1.msra.mxu0 0.0
    %187 = vmatprep.subr.mxu0 0.0
    %188 = vmatpush1.msra.mxu0 0.0
    %189 = vmatprep.mubr.f32.mxu0 0.0
    %190 = vmatmul.mubr.f32.gmra.mrb[0].mxu0 %v120
    %v191 = vpop.f32.mrb[0].mxu0
    %v192 = vadd.f32 %v115, %v191
    %v193 = vpop.f32.mrb[0].mxu0
    %194 = vdwg.mxu0
    %v195 = vld [vmem:[%s4] sm:$0x1]
    %v197 = vlaneseq
    %v198 = vshrl.u32 %v197, 7
    %v199 = vsub.s32 0, %v198
    %v200 = vrot.slane %v195, %v199
    %v202 = vadd.f32 %v192, %v200
    %v203 = vmax.f32 %v202, 0.0
    %v204 = vld [vmem:[%s5] sm:$0xff]
    %v205 = vld [vmem:[%s5 + $0x8] sm:$0xff]
    %v206 = vld [vmem:[%s5 + $0x10] sm:$0xff]
    %v207 = vld [vmem:[%s5 + $0x18] sm:$0xff]
    %v208 = vld [vmem:[%s5 + $0x20] sm:$0xff]
    %v209 = vld [vmem:[%s5 + $0x28] sm:$0xff]
    %v210 = vld [vmem:[%s5 + $0x30] sm:$0xff]
    %v211 = vld [vmem:[%s5 + $0x38] sm:$0xff]
    %v212 = vld [vmem:[%s5 + $0x40] sm:$0xff]
    %v213 = vld [vmem:[%s5 + $0x48] sm:$0xff]
    %v214 = vld [vmem:[%s5 + $0x50] sm:$0xff]
    %v215 = vld [vmem:[%s5 + $0x58] sm:$0xff]
    %v216 = vld [vmem:[%s5 + $0x60] sm:$0xff]
    %v217 = vld [vmem:[%s5 + $0x68] sm:$0xff]
    %v218 = vld [vmem:[%s5 + $0x70] sm:$0xff]
    %v219 = vld [vmem:[%s5 + $0x78] sm:$0xff]
    %v220 = vld [vmem:[%s6] sm:$0x1]
    %v222 = vlaneseq
    %v223 = vshrl.u32 %v222, 7
    %v224 = vsub.s32 0, %v223
    %v225 = vrot.slane %v220, %v224
    %227 = vmatprep.subr.mxu0 0.0
    %228 = vmatpush1.msra.mxu0 %v204
    %229 = vmatprep.subr.mxu0 0.0
    %230 = vmatpush1.msra.mxu0 %v205
    %231 = vmatprep.subr.mxu0 0.0
    %232 = vmatpush1.msra.mxu0 %v206
    %233 = vmatprep.subr.mxu0 0.0
    %234 = vmatpush1.msra.mxu0 %v207
    %235 = vmatprep.subr.mxu0 0.0
    %236 = vmatpush1.msra.mxu0 %v208
    %237 = vmatprep.subr.mxu0 0.0
    %238 = vmatpush1.msra.mxu0 %v209
    %239 = vmatprep.subr.mxu0 0.0
    %240 = vmatpush1.msra.mxu0 %v210
    %241 = vmatprep.subr.mxu0 0.0
    %242 = vmatpush1.msra.mxu0 %v211
    %243 = vmatprep.subr.mxu0 0.0
    %244 = vmatpush1.msra.mxu0 %v212
    %245 = vmatprep.subr.mxu0 0.0
    %246 = vmatpush1.msra.mxu0 %v213
    %247 = vmatprep.subr.mxu0 0.0
    %248 = vmatpush1.msra.mxu0 %v214
    %249 = vmatprep.subr.mxu0 0.0
    %250 = vmatpush1.msra.mxu0 %v215
    %251 = vmatprep.subr.mxu0 0.0
    %252 = vmatpush1.msra.mxu0 %v216
    %253 = vmatprep.subr.mxu0 0.0
    %254 = vmatpush1.msra.mxu0 %v217
    %255 = vmatprep.subr.mxu0 0.0
    %256 = vmatpush1.msra.mxu0 %v218
    %257 = vmatprep.subr.mxu0 0.0
    %258 = vmatpush1.msra.mxu0 %v219
    %259 = vmatprep.subr.mxu0 0.0
    %260 = vmatpush1.msra.mxu0 0.0
    %261 = vmatprep.subr.mxu0 0.0
    %262 = vmatpush1.msra.mxu0 0.0
    %263 = vmatprep.subr.mxu0 0.0
    %264 = vmatpush1.msra.mxu0 0.0
    %265 = vmatprep.subr.mxu0 0.0
    %266 = vmatpush1.msra.mxu0 0.0
    %267 = vmatprep.subr.mxu0 0.0
    %268 = vmatpush1.msra.mxu0 0.0
    %269 = vmatprep.subr.mxu0 0.0
    %270 = vmatpush1.msra.mxu0 0.0
    %271 = vmatprep.subr.mxu0 0.0
    %272 = vmatpush1.msra.mxu0 0.0
    %273 = vmatprep.subr.mxu0 0.0
    %274 = vmatpush1.msra.mxu0 0.0
    %275 = vmatprep.subr.mxu0 0.0
    %276 = vmatpush1.msra.mxu0 0.0
    %277 = vmatprep.subr.mxu0 0.0
    %278 = vmatpush1.msra.mxu0 0.0
    %279 = vmatprep.subr.mxu0 0.0
    %280 = vmatpush1.msra.mxu0 0.0
    %281 = vmatprep.subr.mxu0 0.0
    %282 = vmatpush1.msra.mxu0 0.0
    %283 = vmatprep.subr.mxu0 0.0
    %284 = vmatpush1.msra.mxu0 0.0
    %285 = vmatprep.subr.mxu0 0.0
    %286 = vmatpush1.msra.mxu0 0.0
    %287 = vmatprep.subr.mxu0 0.0
    %288 = vmatpush1.msra.mxu0 0.0
    %289 = vmatprep.subr.mxu0 0.0
    %290 = vmatpush1.msra.mxu0 0.0
    %291 = vmatprep.mubr.f32.mxu0 0.0
    %292 = vmatmul.mubr.f32.gmra.mrb[0].mxu0 %v203
    %v293 = vpop.f32.mrb[0].mxu0
    %v294 = vadd.f32 %v225, %v293
    %v295 = vpop.f32.mrb[0].mxu0
    %296 = vdwg.mxu0
    %v297 = vmax.f32 %v294, 0.0
    %298 = vxpose.xlu0.b32.start [1/16] %v297, 128
    %299 = vxpose.xlu0.b32.cont [2/16] 0.0, 128
    %300 = vxpose.xlu0.b32.cont [3/16] 0.0, 128
    %301 = vxpose.xlu0.b32.cont [4/16] 0.0, 128
    %302 = vxpose.xlu0.b32.cont [5/16] 0.0, 128
    %303 = vxpose.xlu0.b32.cont [6/16] 0.0, 128
    %304 = vxpose.xlu0.b32.cont [7/16] 0.0, 128
    %305 = vxpose.xlu0.b32.cont [8/16] 0.0, 128
    %306 = vxpose.xlu0.b32.cont [9/16] 0.0, 128
    %307 = vxpose.xlu0.b32.cont [10/16] 0.0, 128
    %308 = vxpose.xlu0.b32.cont [11/16] 0.0, 128
    %309 = vxpose.xlu0.b32.cont [12/16] 0.0, 128
    %310 = vxpose.xlu0.b32.cont [13/16] 0.0, 128
    %311 = vxpose.xlu0.b32.cont [14/16] 0.0, 128
    %312 = vxpose.xlu0.b32.cont [15/16] 0.0, 128
    %313 = vxpose.xlu0.b32.end [16/16] 0.0, 128
    %v314 = vpop.trf.xlu0
    %v315 = vpop.trf.xlu0
    %v316 = vpop.trf.xlu0
    %v317 = vpop.trf.xlu0
    %v318 = vpop.trf.xlu0
    %v319 = vpop.trf.xlu0
    %v320 = vpop.trf.xlu0
    %v321 = vpop.trf.xlu0
    %v322 = vpop.trf.xlu0
    %v323 = vpop.trf.xlu0
    %v324 = vpop.trf.xlu0
    %v325 = vpop.trf.xlu0
    %v326 = vpop.trf.xlu0
    %v327 = vpop.trf.xlu0
    %v328 = vpop.trf.xlu0
    %v329 = vpop.trf.xlu0
    %v330 = vld [vmem:[%s7] sm:$0xff]
    %v331 = vld [vmem:[%s7 + $0x8] sm:$0xff]
    %v332 = vld [vmem:[%s7 + $0x10] sm:$0xff]
    %v333 = vld [vmem:[%s7 + $0x18] sm:$0xff]
    %v334 = vld [vmem:[%s7 + $0x20] sm:$0xff]
    %v335 = vld [vmem:[%s7 + $0x28] sm:$0xff]
    %v336 = vld [vmem:[%s7 + $0x30] sm:$0xff]
    %v337 = vld [vmem:[%s7 + $0x38] sm:$0xff]
    %v338 = vld [vmem:[%s7 + $0x40] sm:$0xff]
    %v339 = vld [vmem:[%s7 + $0x48] sm:$0xff]
    %v340 = vld [vmem:[%s7 + $0x50] sm:$0xff]
    %v341 = vld [vmem:[%s7 + $0x58] sm:$0xff]
    %v342 = vld [vmem:[%s7 + $0x60] sm:$0xff]
    %v343 = vld [vmem:[%s7 + $0x68] sm:$0xff]
    %v344 = vld [vmem:[%s7 + $0x70] sm:$0xff]
    %v345 = vld [vmem:[%s7 + $0x78] sm:$0xff]
    %347 = vset.pattern.permute.xlu0 0
    %348 = vperm.xlu0 %347, %v330
    %v349 = vpop.permute.xlu0 %348
    %352 = vset.pattern.permute.xlu0 0
    %353 = vperm.xlu0 %352, %v331
    %v354 = vpop.permute.xlu0 %353
    %357 = vset.pattern.permute.xlu0 0
    %358 = vperm.xlu0 %357, %v332
    %v359 = vpop.permute.xlu0 %358
    %362 = vset.pattern.permute.xlu0 0
    %363 = vperm.xlu0 %362, %v333
    %v364 = vpop.permute.xlu0 %363
    %367 = vset.pattern.permute.xlu0 0
    %368 = vperm.xlu0 %367, %v334
    %v369 = vpop.permute.xlu0 %368
    %372 = vset.pattern.permute.xlu0 0
    %373 = vperm.xlu0 %372, %v335
    %v374 = vpop.permute.xlu0 %373
    %377 = vset.pattern.permute.xlu0 0
    %378 = vperm.xlu0 %377, %v336
    %v379 = vpop.permute.xlu0 %378
    %382 = vset.pattern.permute.xlu0 0
    %383 = vperm.xlu0 %382, %v337
    %v384 = vpop.permute.xlu0 %383
    %387 = vset.pattern.permute.xlu0 0
    %388 = vperm.xlu0 %387, %v338
    %v389 = vpop.permute.xlu0 %388
    %392 = vset.pattern.permute.xlu0 0
    %393 = vperm.xlu0 %392, %v339
    %v394 = vpop.permute.xlu0 %393
    %397 = vset.pattern.permute.xlu0 0
    %398 = vperm.xlu0 %397, %v340
    %v399 = vpop.permute.xlu0 %398
    %402 = vset.pattern.permute.xlu0 0
    %403 = vperm.xlu0 %402, %v341
    %v404 = vpop.permute.xlu0 %403
    %407 = vset.pattern.permute.xlu0 0
    %408 = vperm.xlu0 %407, %v342
    %v409 = vpop.permute.xlu0 %408
    %412 = vset.pattern.permute.xlu0 0
    %413 = vperm.xlu0 %412, %v343
    %v414 = vpop.permute.xlu0 %413
    %417 = vset.pattern.permute.xlu0 0
    %418 = vperm.xlu0 %417, %v344
    %v419 = vpop.permute.xlu0 %418
    %422 = vset.pattern.permute.xlu0 0
    %423 = vperm.xlu0 %422, %v345
    %v424 = vpop.permute.xlu0 %423
    %v426 = vmul.f32 %v314, %v349
    %v427 = vmul.f32 %v315, %v354
    %v428 = vmul.f32 %v316, %v359
    %v429 = vmul.f32 %v317, %v364
    %v430 = vmul.f32 %v318, %v369
    %v431 = vmul.f32 %v319, %v374
    %v432 = vmul.f32 %v320, %v379
    %v433 = vmul.f32 %v321, %v384
    %v434 = vmul.f32 %v322, %v389
    %v435 = vmul.f32 %v323, %v394
    %v436 = vmul.f32 %v324, %v399
    %v437 = vmul.f32 %v325, %v404
    %v438 = vmul.f32 %v326, %v409
    %v439 = vmul.f32 %v327, %v414
    %v440 = vmul.f32 %v328, %v419
    %v441 = vmul.f32 %v329, %v424
    %vm442 = vcmask 64512
    %v443 = vsel %vm442, %v426, 0.0
    %v444 = vsel %vm442, %v427, 0.0
    %v445 = vadd.f32 %v443, %v444
    %v446 = vsel %vm442, %v428, 0.0
    %v447 = vadd.f32 %v445, %v446
    %v448 = vsel %vm442, %v429, 0.0
    %v449 = vadd.f32 %v447, %v448
    %v450 = vsel %vm442, %v430, 0.0
    %v451 = vadd.f32 %v449, %v450
    %v452 = vsel %vm442, %v431, 0.0
    %v453 = vadd.f32 %v451, %v452
    %v454 = vsel %vm442, %v432, 0.0
    %v455 = vadd.f32 %v453, %v454
    %v456 = vsel %vm442, %v433, 0.0
    %v457 = vadd.f32 %v455, %v456
    %v458 = vsel %vm442, %v434, 0.0
    %v459 = vadd.f32 %v457, %v458
    %v460 = vsel %vm442, %v435, 0.0
    %v461 = vadd.f32 %v459, %v460
    %v462 = vsel %vm442, %v436, 0.0
    %v463 = vadd.f32 %v461, %v462
    %v464 = vsel %vm442, %v437, 0.0
    %v465 = vadd.f32 %v463, %v464
    %v466 = vsel %vm442, %v438, 0.0
    %v467 = vadd.f32 %v465, %v466
    %v468 = vsel %vm442, %v439, 0.0
    %v469 = vadd.f32 %v467, %v468
    %v470 = vsel %vm442, %v440, 0.0
    %v471 = vadd.f32 %v469, %v470
    %v472 = vsel %vm442, %v441, 0.0
    %v473 = vadd.f32 %v471, %v472
    %v474 = vrot.slane %v473, 4
    %v475 = vadd.f32 %v473, %v474
    %v476 = vrot.slane %v475, 2
    %v477 = vadd.f32 %v475, %v476
    %v478 = vrot.slane %v477, 1
    %v479 = vadd.f32 %v477, %v478
    %v480 = vld [vmem:[#allocation2] sm:$0x1]
    %482 = vset.pattern.permute.xlu0 0
    %483 = vperm.xlu0 %482, %v480
    %v484 = vpop.permute.xlu0 %483
    %v486 = vlaneseq
    %v487 = vshrl.u32 %v486, 7
    %v488 = vsub.s32 0, %v487
    %v489 = vrot.slane %v484, %v488
    %v490 = vadd.f32 %v479, %v489
    %vm491 = vcmask 57344
    %492 = vst.msk [vmem:[#allocation3] sm:$0x1] %vm491, %v490
    // Predicated region
    $region38: #{critic_forward.1} parent=1 // pred_check
      _
    $region39: #{critic_forward.1} parent=1 // pred_check_branch
      %494 = sbr.rel (0) target = $region41
    $region40: #{critic_forward.1} parent=1 // pred_region
      %s496 = ssub.s32 16, 16
      %497 = vsyncadd [#allocation4], %s496
      %s499 = sshll.u32 [#allocation3], 4
      %s500 = int_to_ptr.vmem [resolvable:$true] %s499
      %502 = dma.vmem_to_hbm [thread:$0]  %s500, 16, %s9, [#allocation4]
    $region41: #{critic_forward.1} parent=1 // pred_fallthru
      _
    // Predicated region
    $region42: #{critic_forward.1} parent=1 // pred_check
      _
    $region43: #{critic_forward.1} parent=1 // pred_check_branch
      %504 = sbr.rel (0) target = $region45
    $region44: #{critic_forward.1} parent=1 // pred_region
      %505 = dma.done [#allocation4], 16
    $region45: #{critic_forward.1} parent=1 // pred_fallthru
      _
    %506 = vsyncpa [#allocation4], 1

</llo_original>
